<compile_context>
chip_gen: v7x
topology: tpu7x:2x2x1
jax: 0.10.0
libtpu: 0.0.40
codegen_flags: <defaults>
</compile_context>

<pallas_src>
import jax
import jax.numpy as jnp
from jax.experimental import pallas as pl
from jax.experimental.pallas import tpu as pltpu

_MAX_DMA_CHUNKS = 8              # max DMAs kept in flight
_MIN_BYTES_PER_CHUNK = 1 << 20   # don't split the copy below ~1 MiB per DMA


def _chunk_bounds(d0, num_chunks):
    """Static (start, size) slices covering [0, d0) along the leading axis."""
    n = max(1, min(num_chunks, d0))
    base, rem = divmod(d0, n)
    bounds, start = [], 0
    for i in range(n):
        size = base + (1 if i < rem else 0)
        bounds.append((start, size))
        start += size
    return bounds


def _make_dma_identity_kernel(chunks):
    """Builds kernel(x_hbm, o_hbm, sem): chunked HBM->HBM async copies."""

    def kernel(x_hbm, o_hbm, sem):
        if chunks is None:  # 0-d input: single whole-array DMA
            copies = [pltpu.make_async_copy(x_hbm, o_hbm, sem.at[0])]
        else:
            copies = [
                pltpu.make_async_copy(
                    x_hbm.at[pl.ds(start, size)],
                    o_hbm.at[pl.ds(start, size)],
                    sem.at[i],
                )
                for i, (start, size) in enumerate(chunks)
            ]
        for cp in copies:   # issue every DMA first ...
            cp.start()
        for cp in copies:   # ... then wait on all of them
            cp.wait()

    return kernel


def identity(x: jax.Array, *, materialize: bool = False, dma_chunks=None) -> jax.Array:
    """Pallas implementation of Identity.forward(x) -> x.

    materialize=False (default): return x unchanged — the correct and fastest
      Identity on every TPU generation (zero HBM traffic, zero kernel work).
    materialize=True: return a fresh buffer with identical contents, produced
      by a chunked HBM->HBM DMA Pallas kernel (no VMEM/vreg round trip).
    dma_chunks: optionally force the number of DMA chunks (useful for tests);
      by default it is derived from the array size (~1 MiB per chunk, max 8).
    """
    if not materialize or x.size == 0:
        return x

    itemsize = jnp.dtype(x.dtype).itemsize
    total_bytes = x.size * itemsize

    if x.ndim == 0:
        chunks = None
        num_sems = 1
    else:
        d0 = x.shape[0]
        if dma_chunks is None:
            want = max(1, min(_MAX_DMA_CHUNKS, total_bytes // _MIN_BYTES_PER_CHUNK))
        else:
            want = max(1, int(dma_chunks))
        chunks = _chunk_bounds(d0, want)
        num_sems = len(chunks)

    return pl.pallas_call(
        _make_dma_identity_kernel(chunks),
        out_shape=jax.ShapeDtypeStruct(x.shape, x.dtype),
        in_specs=[pl.BlockSpec(memory_space=pl.ANY)],
        out_specs=pl.BlockSpec(memory_space=pl.ANY),
        scratch_shapes=[pltpu.SemaphoreType.DMA((num_sems,))],
        cost_estimate=pl.CostEstimate(
            flops=0,
            transcendentals=0,
            bytes_accessed=2 * total_bytes,
        ),
    )(x)


if __name__ == "__main__":
    key = jax.random.PRNGKey(0)
    k0, k1, k2 = jax.random.split(key, 3)

    # Small NCHW input consistent with a typical conv-style forward.
    x = jax.random.normal(k0, (2, 4, 16, 16), dtype=jnp.float32)

    # Default path: true identity — no copy, no kernel.
    y_fast = identity(x)
    assert y_fast.shape == x.shape and y_fast.dtype == x.dtype
    assert bool(jnp.array_equal(y_fast, x))

    # Kernel path: materialized copy via (single-chunk) HBM->HBM DMA.
    y = identity(x, materialize=True)
    jax.block_until_ready(y)
    assert y.shape == x.shape, (y.shape, x.shape)
    assert y.dtype == x.dtype, (y.dtype, x.dtype)
    assert bool(jnp.array_equal(y, x)), "Identity kernel output mismatch"

    # Awkward size (element count not a multiple of 128) + narrow dtype.
    x_odd = jax.random.normal(k1, (3, 5, 7), dtype=jnp.bfloat16)
    y_odd = identity(x_odd, materialize=True)
    jax.block_until_ready(y_odd)
    assert bool(jnp.array_equal(y_odd, x_odd)), "odd-size Identity mismatch"

    # Multi-chunk DMA path (chunk count forced so the test array stays small).
    x_mc = jax.random.normal(k2, (64, 256), dtype=jnp.float32)
    y_mc = identity(x_mc, materialize=True, dma_chunks=4)
    jax.block_until_ready(y_mc)
    assert bool(jnp.array_equal(y_mc, x_mc)), "multi-chunk Identity mismatch"

    print("KERNEL_OK")
</pallas_src>

<mosaic_0001>
module attributes {stable_mosaic.version = 11 : i64} {
  func.func @kernel(%arg0: memref<2x4x16x16xf32, #tpu.memory_space<any>>, %arg1: memref<2x4x16x16xf32, #tpu.memory_space<any>>, %arg2: memref<1x!tpu.dma_semaphore, #tpu.memory_space<semaphore_mem>>) attributes {dimension_semantics = [], scalar_prefetch = 0 : i64, scratch_operands = 1 : i64, tpu.core_type = #tpu.core_type<tc>} {
    %c0_i32 = arith.constant 0 : i32
    %c0_i32_0 = arith.constant 0 : i32
    %c0_i32_1 = arith.constant 0 : i32
    %c0_i32_2 = arith.constant 0 : i32
    %c0_i32_3 = arith.constant 0 : i32
    %0 = tpu.memref_slice %arg0[%c0_i32_0, %c0_i32_1, %c0_i32_2, %c0_i32_3] : memref<2x4x16x16xf32, #tpu.memory_space<any>> -> memref<2x4x16x16xf32, #tpu.memory_space<any>>
    %c0_i32_4 = arith.constant 0 : i32
    %c0_i32_5 = arith.constant 0 : i32
    %c0_i32_6 = arith.constant 0 : i32
    %c0_i32_7 = arith.constant 0 : i32
    %1 = tpu.memref_slice %arg1[%c0_i32_4, %c0_i32_5, %c0_i32_6, %c0_i32_7] : memref<2x4x16x16xf32, #tpu.memory_space<any>> -> memref<2x4x16x16xf32, #tpu.memory_space<any>>
    %2 = tpu.memref_slice %arg2[%c0_i32] : memref<1x!tpu.dma_semaphore, #tpu.memory_space<semaphore_mem>> -> memref<1x!tpu.dma_semaphore, #tpu.memory_space<semaphore_mem>>
    %3 = tpu.memref_squeeze %2 : memref<1x!tpu.dma_semaphore, #tpu.memory_space<semaphore_mem>> -> memref<!tpu.dma_semaphore, #tpu.memory_space<semaphore_mem>>
    tpu.enqueue_dma source(%0 : memref<2x4x16x16xf32, #tpu.memory_space<any>>) target(%1 : memref<2x4x16x16xf32, #tpu.memory_space<any>>) target_semaphore(%3 : memref<!tpu.dma_semaphore, #tpu.memory_space<semaphore_mem>>)
    %c0_i32_8 = arith.constant 0 : i32
    %c0_i32_9 = arith.constant 0 : i32
    %c0_i32_10 = arith.constant 0 : i32
    %c0_i32_11 = arith.constant 0 : i32
    %c0_i32_12 = arith.constant 0 : i32
    %4 = tpu.memref_slice %arg0[%c0_i32_9, %c0_i32_10, %c0_i32_11, %c0_i32_12] : memref<2x4x16x16xf32, #tpu.memory_space<any>> -> memref<2x4x16x16xf32, #tpu.memory_space<any>>
    %c0_i32_13 = arith.constant 0 : i32
    %c0_i32_14 = arith.constant 0 : i32
    %c0_i32_15 = arith.constant 0 : i32
    %c0_i32_16 = arith.constant 0 : i32
    %5 = tpu.memref_slice %arg1[%c0_i32_13, %c0_i32_14, %c0_i32_15, %c0_i32_16] : memref<2x4x16x16xf32, #tpu.memory_space<any>> -> memref<2x4x16x16xf32, #tpu.memory_space<any>>
    %6 = tpu.memref_slice %arg2[%c0_i32_8] : memref<1x!tpu.dma_semaphore, #tpu.memory_space<semaphore_mem>> -> memref<1x!tpu.dma_semaphore, #tpu.memory_space<semaphore_mem>>
    %7 = tpu.memref_squeeze %6 : memref<1x!tpu.dma_semaphore, #tpu.memory_space<semaphore_mem>> -> memref<!tpu.dma_semaphore, #tpu.memory_space<semaphore_mem>>
    tpu.wait_dma2 semaphore(%7 : memref<!tpu.dma_semaphore, #tpu.memory_space<semaphore_mem>>) src(%4 : memref<2x4x16x16xf32, #tpu.memory_space<any>>) dst(%5 : memref<2x4x16x16xf32, #tpu.memory_space<any>>)
    return
  }
}

</mosaic_0001>

<llo_original>
// kernel: tpu_custom_call.1
$region0: #{tpu_custom_call.1}
  #allocation0 [shape = 'u32[]', space=smem, size = 0x4, offset = 0x4, fixed_abs, tag = 'smem constant byte address 0x4 - core index']
  #allocation1 [shape = 'u32[144,128]{1,0:T(1,128)}', space=vmem, size = 0x12000, scoped, tag = 'internal scratch']
  #allocation2 [shape = 's32[1]{0}', space=sflag, size = 0x4, scoped, tag = 'scratch operand']
  #allocation3 [shape = 's32[]', space=sflag, size = 0x4, offset = 0, fixed_abs, tag = 'sflag constant byte address 0x0 - dummy sync flag']
  #allocation4 [shape = 'u32[0]{0}', space=smem, size = 0, offset = 0, fixed_abs, tag = 'smem constant byte address 0x0 - null']
  %s0 = inlined_call_operand.hbm [shape: f32[2,4,16,16], index: 0, kind: input, shape index: {}]
  %s1 = inlined_call_operand.hbm [shape: f32[2,4,16,16], index: 1, kind: output, shape index: {}]
  %s2 = sld [smem:[#allocation0]]
  $region2: #{tpu_custom_call.1} parent=0
    _
  %s4 = ssub.s32 1, %s2
  %s5 = scalar_select 0, %s4, %s2
  %s7 = sshll.u32 1, 14
  %s8 = sxor.u32 4294967295, %s7
  %s11 = sshll.u32 3, 24
  %s12 = sxor.u32 4294967295, %s11
  %s13 = sand.u32 0, %s12
  %s15 = sor.u32 %s13, 0
  %18 = dma.general %s0, 2048, %s1, [#allocation2], [#allocation3], [#allocation4], %s15, 0
  %s19 = smul.u32 2, 4
  %s20 = smul.u32 %s19, 16
  %s21 = smul.u32 %s20, 1
  %s22 = sshll.u32 %s21, 4
  %23 = dma.done [#allocation2], %s22
  %24 = vsyncmov [#allocation2]
  %s25 = vpop.sfrf %24
  %p26 = scmp.eq.s32.totalorder %s25, 0
  %p27 = pneg %p26
  %29 = shalt.err (%p27)

</llo_original>
